<compile_context>
chip_gen: v7x
topology: tpu7x:2x2x1
jax: 0.10.0
libtpu: 0.0.40
codegen_flags: <defaults>
</compile_context>

<pallas_src>
import functools
import math

import jax
import jax.numpy as jnp
from jax.experimental import pallas as pl
from jax.experimental.pallas import tpu as pltpu


# ----------------------------- kernels ------------------------------------ #

def backbone_pool_kernel(x_ref, wc_ref, bc_ref, feats_ref, acc_ref, *, inv_hw):
    p = pl.program_id(1)                     # pixel-tile index ("arbitrary" reduction)

    @pl.when(p == 0)
    def _():
        acc_ref[...] = jnp.zeros_like(acc_ref)

    # backbone stand-in: pointwise conv (bf16 MXU, K = native C) + ReLU
    x = x_ref[0]                                                     # (tile_p, C) bf16
    h = jnp.dot(x, wc_ref[...], preferred_element_type=jnp.float32)  # (tile_p, F_pad) f32
    h = jnp.maximum(h + bc_ref[...], 0.0)

    tp, fp = h.shape
    if tp % 8 == 0:
        # vreg-aligned partial sums: pure VPU adds in the steady state
        acc_ref[...] += jnp.sum(h.reshape(tp // 8, 8, fp), axis=0)   # (8, F_pad)
    else:
        acc_ref[0:1, :] = acc_ref[0:1, :] + jnp.sum(h, axis=0, keepdims=True)

    @pl.when(p == pl.num_programs(1) - 1)
    def _():
        # single cross-sublane collapse + mean, once per image
        feats_ref[0] = jnp.sum(acc_ref[...], axis=0, keepdims=True) * inv_hw


def embed_normalize_kernel(feats_ref, we_ref, be_ref, emb_ref):
    # embedding = nn.Linear(F, E), batched over all B rows; then F.normalize(input)
    emb = jnp.dot(feats_ref[...].astype(jnp.bfloat16), we_ref[...],
                  preferred_element_type=jnp.float32) + be_ref[...]   # (B, E_pad) f32
    inv = jax.lax.rsqrt(
        jnp.maximum(jnp.sum(emb * emb, axis=1, keepdims=True), 1e-24))
    emb_ref[...] = emb * inv


def arc_head_kernel(lbl_ref, emb_ref, waTn_ref, out_ref, *,
                    s, cos_m, sin_m, th, mm, ls_eps, easy_margin,
                    num_classes, tile_n):
    j = pl.program_id(0)                     # class-tile index ("parallel")

    emb_n = emb_ref[...]                                             # (B, E_pad) f32
    # cosine against pre-normalized, pre-transposed weight tile (bf16, f32 accum)
    cosine = jnp.dot(emb_n.astype(jnp.bfloat16), waTn_ref[...],
                     preferred_element_type=jnp.float32)             # (B, tile_n) f32

    # ArcMargin: cos(theta + m), NaN-safe
    sine = jnp.sqrt(jnp.maximum(1.0 - cosine * cosine, 0.0))
    phi = cosine * cos_m - sine * sin_m
    if easy_margin:
        phi = jnp.where(cosine > 0.0, phi, cosine)
    else:
        phi = jnp.where(cosine > th, phi, cosine - mm)

    # blend without materializing one_hot
    lbl = lbl_ref[...]                                               # (B, 1) int32
    col = jax.lax.broadcasted_iota(jnp.int32, cosine.shape, 1) + j * tile_n
    if ls_eps > 0.0:
        oh_on = (1.0 - ls_eps) + ls_eps / num_classes
        oh_off = ls_eps / num_classes
        on_val = oh_on * phi + (1.0 - oh_on) * cosine
        off_val = oh_off * phi + (1.0 - oh_off) * cosine
    else:
        on_val, off_val = phi, cosine

    out_ref[...] = jnp.where(col == lbl, on_val, off_val) * s        # (B, tile_n) f32


# ----------------------------- wrapper ------------------------------------ #

def _round_up(v, mult):
    return ((v + mult - 1) // mult) * mult


def _vmem_cap_bytes():
    """Generation-aware VMEM ceiling (~3/4 of physical; fallback = v7x-safe 48 MiB)."""
    try:
        info = pltpu.get_tpu_info()
        cap = int(getattr(info, "vmem_capacity_bytes", 64 << 20))
    except Exception:
        cap = 64 << 20
    return max(int(cap * 3 // 4), 32 << 20)


def _pick_tile_p(HW, C, F_pad):
    """Largest divisor of HW (preferably a multiple of 8) with a low-MiB footprint."""
    budget = 8 << 20
    per_row = 2 * C * 2 + 2 * F_pad * 4          # bf16 x (double buffered) + f32 h row
    cap = min(max(budget // max(per_row, 1), 8), 8192)
    best_aligned, best_any = None, 1
    d = 1
    while d * d <= HW:
        if HW % d == 0:
            for cand in (d, HW // d):
                if cand <= cap:
                    best_any = max(best_any, cand)
                    if cand % 8 == 0 and (best_aligned is None or cand > best_aligned):
                        best_aligned = cand
        d += 1
    return best_aligned if best_aligned is not None else best_any


def happy_whale_forward(images, labels, params, config, *, tile_p=None, tile_n_cap=4096):
    """images: (B, C, H, W) float32 NCHW; labels: (B,) int."""
    B, C, H, W = images.shape
    HW = H * W
    N = int(config["num_classes"])
    E = int(config["embedding_size"])
    F_feat = params["wc"].shape[1]
    m = float(config["m"])

    F_pad = _round_up(F_feat, 128)
    E_pad = _round_up(E, 128)
    tile_n = min(_round_up(N, 128), tile_n_cap)
    N_pad = _round_up(N, tile_n)
    num_n = N_pad // tile_n

    if tile_p is None:
        tile_p = _pick_tile_p(HW, C, F_pad)
    assert HW % tile_p == 0, "tile_p must divide H*W"
    num_p = HW // tile_p

    # Single fused pass over the image tensor: NCHW -> (B, HW, C) bf16, NO channel pad.
    x = jnp.transpose(images, (0, 2, 3, 1)).reshape(B, HW, C).astype(jnp.bfloat16)

    wc = jnp.pad(params["wc"], ((0, 0), (0, F_pad - F_feat))).astype(jnp.bfloat16)
    bc = jnp.pad(params["bc"], ((0, 0), (0, F_pad - F_feat))).astype(jnp.float32)
    we = jnp.pad(params["we"], ((0, F_pad - F_feat), (0, E_pad - E))).astype(jnp.bfloat16)
    be = jnp.pad(params["be"], ((0, 0), (0, E_pad - E))).astype(jnp.float32)

    # ArcMargin weight: F.normalize rows once in the wrapper (constant data), then
    # transpose to (E, N), pad, cast bf16 -> streamed as lane-dense class tiles.
    wa = params["wa"].astype(jnp.float32)
    wa_n = wa / jnp.maximum(jnp.linalg.norm(wa, axis=1, keepdims=True), 1e-12)
    waTn = jnp.pad(wa_n.T, ((0, E_pad - E), (0, N_pad - N))).astype(jnp.bfloat16)

    lbl = labels.astype(jnp.int32).reshape(B, 1)

    cap = _vmem_cap_bytes()

    # ---- kernel 1: backbone stand-in + global average pool ------------------
    fp1 = (2 * tile_p * C * 2                        # x tiles (bf16, double-buffered)
           + 2 * (wc.size * 2 + bc.size * 4)         # resident weights
           + 2 * F_pad * 4                           # output block
           + 8 * F_pad * 4                           # scratch accumulator
           + 2 * tile_p * F_pad * 4)                 # f32 activation temporaries
    feats = pl.pallas_call(
        functools.partial(backbone_pool_kernel, inv_hw=1.0 / float(HW)),
        out_shape=jax.ShapeDtypeStruct((B, 1, F_pad), jnp.float32),
        grid=(B, num_p),
        in_specs=[
            pl.BlockSpec((1, tile_p, C), lambda b, p: (b, p, 0)),
            pl.BlockSpec((C, F_pad), lambda b, p: (0, 0)),
            pl.BlockSpec((1, F_pad), lambda b, p: (0, 0)),
        ],
        out_specs=pl.BlockSpec((1, 1, F_pad), lambda b, p: (b, 0, 0)),
        scratch_shapes=[pltpu.VMEM((8, F_pad), jnp.float32)],
        compiler_params=pltpu.CompilerParams(
            dimension_semantics=("parallel", "arbitrary"),
            vmem_limit_bytes=int(min(max(fp1 + (8 << 20), 16 << 20), cap)),
        ),
    )(x, wc, bc)
    feats = feats.reshape(B, F_pad)

    # ---- kernel 2: embedding + L2 normalize (batched over all B rows) -------
    emb_n = pl.pallas_call(
        embed_normalize_kernel,
        out_shape=jax.ShapeDtypeStruct((B, E_pad), jnp.float32),
    )(feats, we, be)

    # ---- kernel 3: ArcMargin head, batched over B, class-tiled & parallel ---
    head = functools.partial(
        arc_head_kernel,
        s=float(config["s"]), cos_m=math.cos(m), sin_m=math.sin(m),
        th=math.cos(math.pi - m), mm=math.sin(math.pi - m) * m,
        ls_eps=float(config["ls_eps"]),
        # replicate the original module: easy_margin=config['ls_eps'] (truthiness)
        easy_margin=bool(config["ls_eps"]),
        num_classes=N, tile_n=tile_n)
    fp3 = (2 * B * 4                                 # labels
           + 2 * B * E_pad * 4                       # emb_n
           + 2 * E_pad * tile_n * 2                  # waTn class tiles (bf16, streamed)
           + 2 * B * tile_n * 4                      # output blocks
           + 8 * B * tile_n * 4)                     # f32 temporaries
    out = pl.pallas_call(
        head,
        out_shape=jax.ShapeDtypeStruct((B, N_pad), jnp.float32),
        grid=(num_n,),
        in_specs=[
            pl.BlockSpec((B, 1), lambda j: (0, 0)),
            pl.BlockSpec((B, E_pad), lambda j: (0, 0)),
            pl.BlockSpec((E_pad, tile_n), lambda j: (0, j)),
        ],
        out_specs=pl.BlockSpec((B, tile_n), lambda j: (0, j)),
        compiler_params=pltpu.CompilerParams(
            dimension_semantics=("parallel",),
            vmem_limit_bytes=int(min(max(fp3 + (8 << 20), 16 << 20), cap)),
        ),
    )(lbl, emb_n, waTn)

    return out[:, :N]


# ----------------------------- reference ---------------------------------- #

def reference_forward(images, labels, params, config):
    """Pure-JAX reference mirroring the kernel's bf16-operand / f32-accum chain."""
    B, C, H, W = images.shape
    hp = jax.lax.Precision.HIGHEST
    f32 = jnp.float32
    bf = lambda a: a.astype(jnp.bfloat16).astype(f32)

    x = bf(jnp.transpose(images, (0, 2, 3, 1)).reshape(B, H * W, C))
    h = jnp.maximum(jnp.einsum("bpc,cf->bpf", x, bf(params["wc"]), precision=hp)
                    + params["bc"], 0.0)
    feats = jnp.mean(h, axis=1)
    emb = jnp.dot(bf(feats), bf(params["we"]), precision=hp) + params["be"]
    emb_n = emb / jnp.maximum(jnp.linalg.norm(emb, axis=1, keepdims=True), 1e-12)
    wa = params["wa"]
    wa_n = wa / jnp.maximum(jnp.linalg.norm(wa, axis=1, keepdims=True), 1e-12)
    cosine = jnp.dot(bf(emb_n), bf(wa_n).T, precision=hp)
    sine = jnp.sqrt(jnp.maximum(1.0 - cosine * cosine, 0.0))
    m = float(config["m"])
    cos_m, sin_m = math.cos(m), math.sin(m)
    th, mm = math.cos(math.pi - m), math.sin(math.pi - m) * m
    phi = cosine * cos_m - sine * sin_m
    if bool(config["ls_eps"]):           # original: easy_margin = config['ls_eps']
        phi = jnp.where(cosine > 0, phi, cosine)
    else:
        phi = jnp.where(cosine > th, phi, cosine - mm)
    one_hot = jax.nn.one_hot(labels, config["num_classes"], dtype=f32)
    if config["ls_eps"] > 0:
        one_hot = (1 - config["ls_eps"]) * one_hot + config["ls_eps"] / config["num_classes"]
    return (one_hot * phi + (1.0 - one_hot) * cosine) * config["s"]


def init_params(key, C, F, E, N):
    k1, k2, k3, k4 = jax.random.split(key, 4)

    def xavier(k, fan_in, fan_out, shape):
        lim = math.sqrt(6.0 / (fan_in + fan_out))
        return jax.random.uniform(k, shape, jnp.float32, -lim, lim)

    return {
        # backbone stand-in: pointwise conv (C -> F) + bias
        "wc": xavier(k1, C, F, (C, F)),
        "bc": jnp.zeros((1, F), jnp.float32),
        # embedding linear (F -> E) + bias
        "we": xavier(k2, F, E, (F, E)),
        "be": jax.random.uniform(k3, (1, E), jnp.float32,
                                 -1.0 / math.sqrt(F), 1.0 / math.sqrt(F)),
        # ArcMargin weight (num_classes, E), xavier_uniform like the module
        "wa": xavier(k4, E, N, (N, E)),
    }


if __name__ == "__main__":
    # small shapes consistent with the module
    B, C, H, W = 2, 4, 16, 16           # images: (B, C, H, W)
    backbone_features = 32              # stand-in backbone output width
    config = {
        "embedding_size": 32,
        "num_classes": 16,
        "s": 30.0,
        "m": 0.50,
        "ls_eps": 0.0,
        "device": "tpu",
        "model_name": "synthetic_pointwise_backbone",
    }

    key = jax.random.PRNGKey(0)
    k_img, k_lbl, k_par = jax.random.split(key, 3)
    images = jax.random.normal(k_img, (B, C, H, W), jnp.float32)
    labels = jax.random.randint(k_lbl, (B,), 0, config["num_classes"], jnp.int32)
    params = init_params(k_par, C, backbone_features,
                         config["embedding_size"], config["num_classes"])

    # tile_p=64 -> backbone grid (B, 4): exercises the pixel-reduction pipeline.
    out = happy_whale_forward(images, labels, params, config, tile_p=64)
    out = jax.block_until_ready(out)

    assert out.shape == (B, config["num_classes"]) and out.dtype == jnp.float32
    assert bool(jnp.all(jnp.isfinite(out)))

    ref = reference_forward(images, labels, params, config)
    assert bool(jnp.allclose(out, ref, rtol=5e-2, atol=2e-1)), (
        f"max abs diff {float(jnp.max(jnp.abs(out - ref)))}")

    print("KERNEL_OK")
</pallas_src>

<mosaic_0001>
module attributes {stable_mosaic.version = 11 : i64} {
  func.func @backbone_pool_kernel(%arg0: i32, %arg1: i32, %arg2: memref<1x64x4xbf16, #tpu.memory_space<vmem>>, %arg3: memref<4x128xbf16, #tpu.memory_space<vmem>>, %arg4: memref<1x128xf32, #tpu.memory_space<vmem>>, %arg5: memref<1x1x128xf32, #tpu.memory_space<vmem>>, %arg6: memref<8x128xf32, #tpu.memory_space<vmem>>) attributes {dimension_semantics = [#tpu.dimension_semantics<parallel>, #tpu.dimension_semantics<arbitrary>], iteration_bounds = array<i64: 2, 4>, scalar_prefetch = 0 : i64, scratch_operands = 1 : i64, tpu.core_type = #tpu.core_type<tc>, window_params = [{transform_indices = @transform_0, window_bounds = array<i64: 1, 64, 4>}, {pipeline_mode = #tpu.pipeline_mode<synchronous>, transform_indices = @transform_1, window_bounds = array<i64: 4, 128>}, {pipeline_mode = #tpu.pipeline_mode<synchronous>, transform_indices = @transform_2, window_bounds = array<i64: 1, 128>}, {transform_indices = @transform_3, window_bounds = array<i64: 1, 1, 128>}]} {
    %c0_i32 = arith.constant 0 : i32
    %0 = arith.cmpi eq, %arg1, %c0_i32 : i32
    %1 = arith.extui %0 : i1 to i32
    %c0_i32_0 = arith.constant 0 : i32
    %2 = arith.cmpi ne, %1, %c0_i32_0 : i32
    scf.if %2 {
      %cst_14 = arith.constant 0.000000e+00 : f32
      %20 = vector.broadcast %cst_14 : f32 to vector<8x128xf32>
      %c0_15 = arith.constant 0 : index
      %c0_16 = arith.constant 0 : index
      %21 = vector.load %arg6[%c0_15, %c0_16] : memref<8x128xf32, #tpu.memory_space<vmem>>, vector<8x128xf32>
      tpu.vector_store %arg6[%c0_15, %c0_16], %20 {strides = array<i32>} : memref<8x128xf32, #tpu.memory_space<vmem>>, vector<8x128xf32>,
    } else {
    }
    %c0 = arith.constant 0 : index
    %c0_1 = arith.constant 0 : index
    %c0_2 = arith.constant 0 : index
    %3 = vector.load %arg2[%c0, %c0_1, %c0_2] : memref<1x64x4xbf16, #tpu.memory_space<vmem>>, vector<1x64x4xbf16>
    %4 = vector.shape_cast %3 : vector<1x64x4xbf16> to vector<64x4xbf16>
    %c0_3 = arith.constant 0 : index
    %c0_4 = arith.constant 0 : index
    %5 = vector.load %arg3[%c0_3, %c0_4] : memref<4x128xbf16, #tpu.memory_space<vmem>>, vector<4x128xbf16>
    %cst = arith.constant dense<0.000000e+00> : vector<64x128xf32>
    %6 = tpu.matmul %4, %5, %cst {dimension_numbers = #tpu.dot_dimension_numbers<[1], [0], [0], [1], [0, 0, 1, 1], [], []>} : vector<64x4xbf16>, vector<4x128xbf16>, vector<64x128xf32> -> vector<64x128xf32>
    %c0_5 = arith.constant 0 : index
    %c0_6 = arith.constant 0 : index
    %7 = vector.load %arg4[%c0_5, %c0_6] : memref<1x128xf32, #tpu.memory_space<vmem>>, vector<1x128xf32>
    %8 = vector.broadcast %7 : vector<1x128xf32> to vector<64x128xf32>
    %9 = arith.addf %6, %8 : vector<64x128xf32>
    %cst_7 = arith.constant 0.000000e+00 : f32
    %10 = vector.broadcast %cst_7 : f32 to vector<64x128xf32>
    %11 = arith.maximumf %9, %10 : vector<64x128xf32>
    %c0_8 = arith.constant 0 : index
    %c0_9 = arith.constant 0 : index
    %12 = vector.load %arg6[%c0_8, %c0_9] : memref<8x128xf32, #tpu.memory_space<vmem>>, vector<8x128xf32>
    %13 = vector.shape_cast %11 : vector<64x128xf32> to vector<8x8x128xf32>
    %cst_10 = arith.constant dense<0.000000e+00> : vector<8x128xf32>
    %14 = vector.multi_reduction <add>, %13, %cst_10 [0] : vector<8x8x128xf32> to vector<8x128xf32>
    %15 = arith.addf %12, %14 : vector<8x128xf32>
    %c0_11 = arith.constant 0 : index
    %c0_12 = arith.constant 0 : index
    %16 = vector.load %arg6[%c0_11, %c0_12] : memref<8x128xf32, #tpu.memory_space<vmem>>, vector<8x128xf32>
    tpu.vector_store %arg6[%c0_11, %c0_12], %15 {strides = array<i32>} : memref<8x128xf32, #tpu.memory_space<vmem>>, vector<8x128xf32>,
    %c3_i32 = arith.constant 3 : i32
    %17 = arith.cmpi eq, %arg1, %c3_i32 : i32
    %18 = arith.extui %17 : i1 to i32
    %c0_i32_13 = arith.constant 0 : i32
    %19 = arith.cmpi ne, %18, %c0_i32_13 : i32
    scf.if %19 {
      %c0_14 = arith.constant 0 : index
      %c0_15 = arith.constant 0 : index
      %20 = vector.load %arg6[%c0_14, %c0_15] : memref<8x128xf32, #tpu.memory_space<vmem>>, vector<8x128xf32>
      %cst_16 = arith.constant dense<0.000000e+00> : vector<128xf32>
      %21 = vector.multi_reduction <add>, %20, %cst_16 [0] : vector<8x128xf32> to vector<128xf32>
      %22 = vector.shape_cast %21 : vector<128xf32> to vector<1x128xf32>
      %cst_17 = arith.constant 3.906250e-03 : f32
      %23 = vector.broadcast %cst_17 : f32 to vector<1x128xf32>
      %24 = arith.mulf %22, %23 : vector<1x128xf32>
      %c0_18 = arith.constant 0 : index
      %c0_19 = arith.constant 0 : index
      %c0_20 = arith.constant 0 : index
      %25 = vector.load %arg5[%c0_18, %c0_19, %c0_20] : memref<1x1x128xf32, #tpu.memory_space<vmem>>, vector<1x1x128xf32>
      %26 = vector.shape_cast %25 : vector<1x1x128xf32> to vector<1x128xf32>
      %27 = vector.shape_cast %24 : vector<1x128xf32> to vector<1x1x128xf32>
      tpu.vector_store %arg5[%c0_18, %c0_19, %c0_20], %27 {strides = array<i32>} : memref<1x1x128xf32, #tpu.memory_space<vmem>>, vector<1x1x128xf32>,
    } else {
    }
    return
  }
  func.func @transform_0(%arg0: i32, %arg1: i32) -> (i32, i32, i32) {
    %c0_i32 = arith.constant 0 : i32
    %c0_i32_0 = arith.constant 0 : i32
    return %arg0, %arg1, %c0_i32 : i32, i32, i32
  }
  func.func @transform_1(%arg0: i32, %arg1: i32) -> (i32, i32) {
    %c0_i32 = arith.constant 0 : i32
    %c0_i32_0 = arith.constant 0 : i32
    %c0_i32_1 = arith.constant 0 : i32
    return %c0_i32, %c0_i32_0 : i32, i32
  }
  func.func @transform_2(%arg0: i32, %arg1: i32) -> (i32, i32) {
    %c0_i32 = arith.constant 0 : i32
    %c0_i32_0 = arith.constant 0 : i32
    %c0_i32_1 = arith.constant 0 : i32
    return %c0_i32, %c0_i32_0 : i32, i32
  }
  func.func @transform_3(%arg0: i32, %arg1: i32) -> (i32, i32, i32) {
    %c0_i32 = arith.constant 0 : i32
    %c0_i32_0 = arith.constant 0 : i32
    %c0_i32_1 = arith.constant 0 : i32
    return %arg0, %c0_i32, %c0_i32_0 : i32, i32, i32
  }
}

</mosaic_0001>

<llo_original>
// kernel: tpu_custom_call.1
$region0: #{tpu_custom_call.1}
  #allocation0 [shape = 'u32[]', space=smem, size = 0x4, offset = 0x4, fixed_abs, tag = 'smem constant byte address 0x4 - core index']
  #allocation1 [shape = 'u32[144,128]{1,0:T(1,128)}', space=vmem, size = 0x12000, scoped, tag = 'internal scratch']
  #allocation2 [shape = 'f32[8,128]{1,0:T(8,128)}', space=vmem, size = 0x1000, scoped, tag = 'scratch operand']
  %s0 = inlined_call_operand.vmem [shape: bf16[2,256,4], index: 0, kind: input, shape index: {}]
  %s1 = inlined_call_operand.vmem [shape: bf16[4,128], index: 1, kind: input, shape index: {}]
  %s2 = inlined_call_operand.vmem [shape: f32[1,128], index: 2, kind: input, shape index: {}]
  %s3 = inlined_call_operand.hbm [shape: f32[2,1,128], index: 3, kind: output, shape index: {}]
  %s4 = sld [smem:[#allocation0]]
  $region53: #{tpu_custom_call.1} parent=0
    _
  %s6 = ssub.s32 1, %s4
  %s7 = scalar_select 0, %s6, %s4
  $region1: #{tpu_custom_call.1} parent=0
    #allocation3 [shape = 'u8[1024]{0}', space=vmem, size = 0x400, scoped, tag = 'output window, operand 0']
    #allocation4 [shape = 's32[2]{0}', space=sflag, size = 0x8, scoped, tag = 'scoped memory for tpu_custom_call.1']
    %8 = vsyncpa [#allocation4], 0
    %s9 = scalar_lea.sflag [#allocation4], 1
    %10 = vsyncpa %s9, 0
    loop: start=0, step=1, limit=10
    $region2: #{tpu_custom_call.1} parent=1 // loop_pre_header
      _
    $region3: #{tpu_custom_call.1} parent=1 // loop_header
      %s12 = sphi 0, %s16
      %p13 = scmp.ge.s32.totalorder %s12, 10
      %s19 = sphi 0, %s31
      %s20 = sphi 0, %s27
      %s21 = sphi 0, %s19
      %s22 = sphi 0, %s20
      %s23 = sphi 0, %s21
      %s24 = sphi 0, %s22
      %s36 = sphi 0, %s38
      %s39 = sphi 0, %s36
      %s40 = sphi 0, %s39
      %s56 = sphi 0, %s40
      %s60 = sphi 0, %s60
      %s62 = sphi 0, %s60
      %s63 = sphi 0, %s62
      %s77 = sphi 0, %s63
      %s81 = sphi 0, %s81
      %s83 = sphi 0, %s81
      %s84 = sphi 0, %s83
      %s98 = sphi 0, %s84
      %s104 = sphi 0, %s106
      %s107 = sphi 0, %s104
      %s108 = sphi 0, %s107
      %s124 = sphi 0, %s108
    $region4: #{tpu_custom_call.1} parent=1 // loop_header_branch
      %15 = sbr.rel (%p13) target = $region8
    $region5: #{tpu_custom_call.1} parent=1 // loop_body
      %s17 = ssub.s32 %s12, 1
      %s18 = ssub.s32 %s12, 2
      %s25 = sadd.s32 1, %s20
      %p26 = scmp.ge.s32.totalorder %s25, 4
      %s27 = scalar_select %p26, 0, %s25
      %s28 = sadd.s32 1, %s19
      %s29 = scalar_select %p26, %s28, %s19
      %p30 = scmp.ge.s32.totalorder %s29, 2
      %s31 = scalar_select %p30, 0, %s29
      %s32 = ssub.s32 %s19, %s31
      %s33 = ssub.s32 %s20, %s27
      %s34 = sor.u32 %s32, %s33
      %p35 = scmp.eq.s32.totalorder %s34, 0
      %s37 = sadd.s32 %s36, 1
      %s38 = scalar_select %p35, %s36, %s37
      %p41 = pneg %p35
      %p42 = scmp.eq.s32.totalorder %s12, 7
      %p43 = por %p41, %p42
      %p44 = scmp.ne.s32.totalorder %s36, %s39
      %p45 = scmp.eq.s32.totalorder %s12, 0
      %p46 = por %p44, %p45
      %p47 = scmp.ne.s32.totalorder %s36, %s39
      %p48 = scmp.eq.s32.totalorder %s17, 7
      %p49 = por %p47, %p48
      %p50 = scmp.ne.s32.totalorder %s39, %s40
      %p51 = scmp.eq.s32.totalorder %s17, 0
      %p52 = por %p50, %p51
      %p53 = scmp.ne.s32.totalorder %s39, %s40
      %p54 = scmp.eq.s32.totalorder %s18, 7
      %p55 = por %p53, %p54
      %p57 = scmp.ne.s32.totalorder %s40, %s56
      %p58 = scmp.eq.s32.totalorder %s18, 0
      %p59 = por %p57, %p58
      %s61 = sadd.s32 %s60, 1
      %p64 = scmp.eq.s32.totalorder %s12, 7
      %p65 = scmp.ne.s32.totalorder %s60, %s62
      %p66 = scmp.eq.s32.totalorder %s12, 0
      %p67 = por %p65, %p66
      %p68 = scmp.ne.s32.totalorder %s60, %s62
      %p69 = scmp.eq.s32.totalorder %s17, 7
      %p70 = por %p68, %p69
      %p71 = scmp.ne.s32.totalorder %s62, %s63
      %p72 = scmp.eq.s32.totalorder %s17, 0
      %p73 = por %p71, %p72
      %p74 = scmp.ne.s32.totalorder %s62, %s63
      %p75 = scmp.eq.s32.totalorder %s18, 7
      %p76 = por %p74, %p75
      %p78 = scmp.ne.s32.totalorder %s63, %s77
      %p79 = scmp.eq.s32.totalorder %s18, 0
      %p80 = por %p78, %p79
      %s82 = sadd.s32 %s81, 1
      %p85 = scmp.eq.s32.totalorder %s12, 7
      %p86 = scmp.ne.s32.totalorder %s81, %s83
      %p87 = scmp.eq.s32.totalorder %s12, 0
      %p88 = por %p86, %p87
      %p89 = scmp.ne.s32.totalorder %s81, %s83
      %p90 = scmp.eq.s32.totalorder %s17, 7
      %p91 = por %p89, %p90
      %p92 = scmp.ne.s32.totalorder %s83, %s84
      %p93 = scmp.eq.s32.totalorder %s17, 0
      %p94 = por %p92, %p93
      %p95 = scmp.ne.s32.totalorder %s83, %s84
      %p96 = scmp.eq.s32.totalorder %s18, 7
      %p97 = por %p95, %p96
      %p99 = scmp.ne.s32.totalorder %s84, %s98
      %p100 = scmp.eq.s32.totalorder %s18, 0
      %p101 = por %p99, %p100
      %s102 = ssub.s32 %s19, %s31
      %p103 = scmp.eq.s32.totalorder %s102, 0
      %s105 = sadd.s32 %s104, 1
      %s106 = scalar_select %p103, %s104, %s105
      %p109 = pneg %p103
      %p110 = scmp.eq.s32.totalorder %s12, 7
      %p111 = por %p109, %p110
      %p112 = scmp.ne.s32.totalorder %s104, %s107
      %p113 = scmp.eq.s32.totalorder %s12, 0
      %p114 = por %p112, %p113
      %p115 = scmp.ne.s32.totalorder %s104, %s107
      %p116 = scmp.eq.s32.totalorder %s17, 7
      %p117 = por %p115, %p116
      %p118 = scmp.ne.s32.totalorder %s107, %s108
      %p119 = scmp.eq.s32.totalorder %s17, 0
      %p120 = por %p118, %p119
      %p121 = scmp.ne.s32.totalorder %s107, %s108
      %p122 = scmp.eq.s32.totalorder %s18, 7
      %p123 = por %p121, %p122
      %p125 = scmp.ne.s32.totalorder %s108, %s124
      %p126 = scmp.eq.s32.totalorder %s18, 0
      %p127 = por %p125, %p126
      %p128 = scmp.le.s32.totalorder 1, %s12
      %p129 = scmp.lt.s32.totalorder %s12, 9
      %p130 = pnand %p128, %p129
      %p131 = pneg %p130
      // Predicated region
      $region9: #{tpu_custom_call.1} parent=5 // pred_check
        _
      $region10: #{tpu_custom_call.1} parent=5 // pred_check_branch
        %133 = sbr.rel (%p130) target = $region12
      $region11: #{tpu_custom_call.1} parent=5 // pred_region
        %s134 = ssub.s32 %s12, 1
        // Predicated region
        $region13: #{tpu_custom_call.1} parent=11 // pred_check
          %p135 = pneg %p73
        $region14: #{tpu_custom_call.1} parent=11 // pred_check_branch
          %137 = sbr.rel (%p135) target = $region16
        $region15: #{tpu_custom_call.1} parent=11 // pred_region
          _
        $region16: #{tpu_custom_call.1} parent=11 // pred_fallthru
          _
        // Predicated region
        $region17: #{tpu_custom_call.1} parent=11 // pred_check
          %p138 = pneg %p94
        $region18: #{tpu_custom_call.1} parent=11 // pred_check_branch
          %140 = sbr.rel (%p138) target = $region20
        $region19: #{tpu_custom_call.1} parent=11 // pred_region
          _
        $region20: #{tpu_custom_call.1} parent=11 // pred_fallthru
          _
      $region12: #{tpu_custom_call.1} parent=5 // pred_fallthru
        _
      %p141 = scmp.lt.s32.totalorder %s12, 8
      // Predicated region
      $region21: #{tpu_custom_call.1} parent=5 // pred_check
        %p142 = pneg %p141
      $region22: #{tpu_custom_call.1} parent=5 // pred_check_branch
        %144 = sbr.rel (%p142) target = $region24
      $region23: #{tpu_custom_call.1} parent=5 // pred_region
        // Predicated region
        $region25: #{tpu_custom_call.1} parent=23 // pred_check
          %p145 = pneg %p46
        $region26: #{tpu_custom_call.1} parent=23 // pred_check_branch
          %147 = sbr.rel (%p145) target = $region28
        $region27: #{tpu_custom_call.1} parent=23 // pred_region
          %s148 = smul.u32 8, %s20
          %p149 = scmp.lt.s32.totalorder %s19, 1
          %s150 = scalar_select %p149, %s19, 1
          %p151 = scmp.lt.s32.totalorder %s148, 31
          %s152 = scalar_select %p151, %s148, 31
          %s153 = smul.addr %s150, 32
          %s154 = sadd.s32 %s152, %s153
          %s155 = smul.addr %s154, 4
          %s156 = scalar_lea.vmem %s0, %s155
          %s157 = smul.u32 8, %s20
        $region28: #{tpu_custom_call.1} parent=23 // pred_fallthru
          _
      $region24: #{tpu_custom_call.1} parent=5 // pred_fallthru
        _
      %p158 = scmp.le.s32.totalorder 1, %s12
      %p159 = scmp.lt.s32.totalorder %s12, 9
      %p160 = pnand %p158, %p159
      %p161 = pneg %p160
      // Predicated region
      $region29: #{tpu_custom_call.1} parent=5 // pred_check
        _
      $region30: #{tpu_custom_call.1} parent=5 // pred_check_branch
        %163 = sbr.rel (%p160) target = $region32
      $region31: #{tpu_custom_call.1} parent=5 // pred_region
        %s164 = ssub.s32 %s12, 1
        %s165 = smul.u32 8, %s22
        %p166 = scmp.lt.s32.totalorder %s21, 1
        %s167 = scalar_select %p166, %s21, 1
        %p168 = scmp.lt.s32.totalorder %s165, 31
        %s169 = scalar_select %p168, %s165, 31
        %s170 = smul.addr %s167, 32
        %s171 = sadd.s32 %s169, %s170
        %s172 = smul.addr %s171, 4
        %s173 = scalar_lea.vmem %s0, %s172
        %p174 = pneg %p52
        %p175 = pneg %p49
        %p176 = pneg %p73
        %p177 = pneg %p70
        %p178 = pneg %p94
        %p179 = pneg %p91
        %p180 = pneg %p120
        %p181 = pneg %p117
        %s182 = sand.u32 %s107, 1
        %s183 = scalar_lea.sflag [#allocation4], %s182
        %s184 = sand.u32 %s107, 1
        %s185 = scalar_lea.vmem [#allocation3], %s184
        %s186 = smul.u32 8, %s22
        %p187 = scmp.lt.s32.totalorder %s21, 1
        %s188 = scalar_select %p187, %s21, 1
        %p189 = scmp.lt.s32.totalorder %s186, 31
        %s190 = scalar_select %p189, %s186, 31
        %s191 = smul.addr %s188, 32
        %s192 = sadd.s32 %s190, %s191
        %s193 = smul.addr %s192, 4
        %s194 = scalar_lea.vmem %s0, %s193
        %s195 = smul.u32 8, %s22
        %p197 = scmp.eq.s32.totalorder %s22, 0
        // Predicated region
        $region33: #{tpu_custom_call.1} parent=31 // pred_check
          %p198 = pneg %p197
        $region34: #{tpu_custom_call.1} parent=31 // pred_check_branch
          %200 = sbr.rel (%p198) target = $region36
        $region35: #{tpu_custom_call.1} parent=31 // pred_region
          %201 = vst [vmem:[#allocation2] sm:$0xff] 0.0
        $region36: #{tpu_custom_call.1} parent=31 // pred_fallthru
          _
        %v202 = vld [vmem:[%s194] sm:$0xf]
        %v203 = vld [vmem:[%s194 + $0x4] sm:$0xf]
        %v204 = vld [vmem:[%s194 + $0x8] sm:$0xf]
        %v205 = vld [vmem:[%s194 + $0xc] sm:$0xf]
        %v206 = vld [vmem:[%s194 + $0x10] sm:$0xf]
        %v207 = vld [vmem:[%s194 + $0x14] sm:$0xf]
        %v208 = vld [vmem:[%s194 + $0x18] sm:$0xf]
        %v209 = vld [vmem:[%s194 + $0x1c] sm:$0xf]
        %v210 = vld [vmem:[%s1] sm:$0x3]
        %v211 = vld [vmem:[%s2] sm:$0x1]
        %v213 = vlaneseq
        %v214 = vshrl.u32 %v213, 7
        %v215 = vsub.s32 0, %v214
        %v216 = vrot.slane %v211, %v215
        %v226 = vunpack.c.l.b16 %v202
        %v227 = vunpack.c.l.b16 %v203
        %v228 = vunpack.c.l.b16 %v204
        %v229 = vunpack.c.l.b16 %v205
        %v230 = vunpack.c.l.b16 %v206
        %v231 = vunpack.c.l.b16 %v207
        %v232 = vunpack.c.l.b16 %v208
        %v233 = vunpack.c.l.b16 %v209
        %v234 = vpack.c.b16 %v227, %v226
        %v235 = vpack.c.b16 %v229, %v228
        %v236 = vpack.c.b16 %v231, %v230
        %v237 = vpack.c.b16 %v233, %v232
        %vm238 = vcmask 31744
        %v240 = vsel %vm238, %v234, 0
        %v243 = vsel %vm238, %v235, 0
        %v246 = vsel %vm238, %v236, 0
        %v249 = vsel %vm238, %v237, 0
        %vm251 = vcmask 1041408
        %v253 = vsel %vm251, %v210, 0
        %255 = vmatprep.subr.bf16.mxu0 0
        %256 = vmatpush1.bf16.msra.mxu0 %v253
        %257 = vmatprep.subr.bf16.mxu0 0
        %258 = vmatpush1.bf16.msra.mxu0 0
        %259 = vmatprep.subr.bf16.mxu0 0
        %260 = vmatpush1.bf16.msra.mxu0 0
        %261 = vmatprep.subr.bf16.mxu0 0
        %262 = vmatpush1.bf16.msra.mxu0 0
        %263 = vmatprep.subr.bf16.mxu0 0
        %264 = vmatpush1.bf16.msra.mxu0 0
        %265 = vmatprep.subr.bf16.mxu0 0
        %266 = vmatpush1.bf16.msra.mxu0 0
        %267 = vmatprep.subr.bf16.mxu0 0
        %268 = vmatpush1.bf16.msra.mxu0 0
        %269 = vmatprep.subr.bf16.mxu0 0
        %270 = vmatpush1.bf16.msra.mxu0 0
        %271 = vmatprep.subr.bf16.mxu0 0
        %272 = vmatpush1.bf16.msra.mxu0 0
        %273 = vmatprep.subr.bf16.mxu0 0
        %274 = vmatpush1.bf16.msra.mxu0 0
        %275 = vmatprep.subr.bf16.mxu0 0
        %276 = vmatpush1.bf16.msra.mxu0 0
        %277 = vmatprep.subr.bf16.mxu0 0
        %278 = vmatpush1.bf16.msra.mxu0 0
        %279 = vmatprep.subr.bf16.mxu0 0
        %280 = vmatpush1.bf16.msra.mxu0 0
        %281 = vmatprep.subr.bf16.mxu0 0
        %282 = vmatpush1.bf16.msra.mxu0 0
        %283 = vmatprep.subr.bf16.mxu0 0
        %284 = vmatpush1.bf16.msra.mxu0 0
        %285 = vmatprep.subr.bf16.mxu0 0
        %286 = vmatpush1.bf16.msra.mxu0 0
        %287 = vmatprep.mubr.bf16.mxu0 0
        %288 = vmatmul.mubr.bf16.gmra.mrb[0].mxu0 %v240
        %v289 = vpop.f32.mrb[0].mxu0
        %v290 = vadd.f32 %v216, %v289
        %v291 = vpop.f32.mrb[0].mxu0
        %v292 = vpop.f32.mrb[0].mxu0
        %v293 = vadd.f32 %v216, %v292
        %v294 = vpop.f32.mrb[0].mxu0
        %295 = vmatprep.mubr.bf16.mxu0 0
        %296 = vmatmul.mubr.bf16.gmra.mrb[0].mxu0 %v243
        %v297 = vpop.f32.mrb[0].mxu0
        %v298 = vadd.f32 %v216, %v297
        %v299 = vpop.f32.mrb[0].mxu0
        %v300 = vpop.f32.mrb[0].mxu0
        %v301 = vadd.f32 %v216, %v300
        %v302 = vpop.f32.mrb[0].mxu0
        %303 = vmatprep.mubr.bf16.mxu0 0
        %304 = vmatmul.mubr.bf16.gmra.mrb[0].mxu0 %v246
        %v305 = vpop.f32.mrb[0].mxu0
        %v306 = vadd.f32 %v216, %v305
        %v307 = vpop.f32.mrb[0].mxu0
        %v308 = vpop.f32.mrb[0].mxu0
        %v309 = vadd.f32 %v216, %v308
        %v310 = vpop.f32.mrb[0].mxu0
        %311 = vmatprep.mubr.bf16.mxu0 0
        %312 = vmatmul.mubr.bf16.gmra.mrb[0].mxu0 %v249
        %v313 = vpop.f32.mrb[0].mxu0
        %v314 = vadd.f32 %v216, %v313
        %v315 = vpop.f32.mrb[0].mxu0
        %v316 = vpop.f32.mrb[0].mxu0
        %v317 = vadd.f32 %v216, %v316
        %v318 = vpop.f32.mrb[0].mxu0
        %319 = vdwg.mxu0
        %v320 = vmax.f32 %v290, 0.0
        %v321 = vmax.f32 %v293, 0.0
        %v322 = vmax.f32 %v298, 0.0
        %v323 = vmax.f32 %v301, 0.0
        %v324 = vmax.f32 %v306, 0.0
        %v325 = vmax.f32 %v309, 0.0
        %v326 = vmax.f32 %v314, 0.0
        %v327 = vmax.f32 %v317, 0.0
        %v328 = vld [vmem:[#allocation2] sm:$0xff]
        %v329 = vadd.f32 %v320, %v321
        %v330 = vadd.f32 %v329, %v322
        %v331 = vadd.f32 %v330, %v323
        %v332 = vadd.f32 %v331, %v324
        %v333 = vadd.f32 %v332, %v325
        %v334 = vadd.f32 %v333, %v326
        %v335 = vadd.f32 %v334, %v327
        %v336 = vadd.f32 %v328, %v335
        %337 = vst [vmem:[#allocation2] sm:$0xff] %v336
        %p338 = scmp.eq.s32.totalorder %s22, 3
        // Predicated region
        $region37: #{tpu_custom_call.1} parent=31 // pred_check
          %p339 = pneg %p338
        $region38: #{tpu_custom_call.1} parent=31 // pred_check_branch
          %341 = sbr.rel (%p339) target = $region40
        $region39: #{tpu_custom_call.1} parent=31 // pred_region
          %v342 = vld [vmem:[#allocation2] sm:$0xff]
          %v343 = vrot.slane %v342, 4
          %v344 = vadd.f32 %v342, %v343
          %v345 = vrot.slane %v344, 2
          %v346 = vadd.f32 %v344, %v345
          %v347 = vrot.slane %v346, 1
          %v348 = vadd.f32 %v346, %v347
          %v349 = vmul.f32 %v348, 0.00390625
          %350 = vst [vmem:[%s185] sm:$0x1] %v349
        $region40: #{tpu_custom_call.1} parent=31 // pred_fallthru
          _
        %s351 = sand.u32 %s107, 1
        %s352 = scalar_lea.sflag [#allocation4], %s351
        %s353 = sand.u32 %s107, 1
        %s354 = scalar_lea.vmem [#allocation3], %s353
        // Predicated region
        $region41: #{tpu_custom_call.1} parent=31 // pred_check
          %p355 = pneg %p117
        $region42: #{tpu_custom_call.1} parent=31 // pred_check_branch
          %357 = sbr.rel (%p355) target = $region44
        $region43: #{tpu_custom_call.1} parent=31 // pred_region
          %s359 = ssub.s32 16, 16
          %360 = vsyncadd %s352, %s359
          %s361 = smul.addr %s21, 16
          %s362 = scalar_lea.hbm %s3, %s361
          %s364 = sshll.u32 %s354, 4
          %s365 = int_to_ptr.vmem [resolvable:$true] %s364
          %367 = dma.vmem_to_hbm [thread:$0]  %s365, 16, %s362, %s352
        $region44: #{tpu_custom_call.1} parent=31 // pred_fallthru
          _
      $region32: #{tpu_custom_call.1} parent=5 // pred_fallthru
        _
      %p368 = scmp.le.s32.totalorder 2, %s12
      // Predicated region
      $region45: #{tpu_custom_call.1} parent=5 // pred_check
        %p369 = pneg %p368
      $region46: #{tpu_custom_call.1} parent=5 // pred_check_branch
        %371 = sbr.rel (%p369) target = $region48
      $region47: #{tpu_custom_call.1} parent=5 // pred_region
        %s372 = ssub.s32 %s12, 2
        // Predicated region
        $region49: #{tpu_custom_call.1} parent=47 // pred_check
          %p373 = pneg %p123
        $region50: #{tpu_custom_call.1} parent=47 // pred_check_branch
          %375 = sbr.rel (%p373) target = $region52
        $region51: #{tpu_custom_call.1} parent=47 // pred_region
          %s376 = sand.u32 %s108, 1
          %s377 = scalar_lea.sflag [#allocation4], %s376
          %s378 = sand.u32 %s108, 1
          %s379 = scalar_lea.vmem [#allocation3], %s378
          %380 = dma.done %s377, 16
        $region52: #{tpu_custom_call.1} parent=47 // pred_fallthru
          _
      $region48: #{tpu_custom_call.1} parent=5 // pred_fallthru
        _
    $region6: #{tpu_custom_call.1} parent=1 // loop_footer
      %s16 = sadd.s32 1, %s12
    $region7: #{tpu_custom_call.1} parent=1 // loop_footer_branch
      %11 = sbr.rel target = $region3
    $region8: #{tpu_custom_call.1} parent=1 // loop_exit
      _
    %381 = vsyncpa [#allocation4], 1
    %s382 = scalar_lea.sflag [#allocation4], 1
    %383 = vsyncpa %s382, 1

</llo_original>
